<compile_context>
chip_gen: v7x
topology: tpu7x:2x2x1
jax: 0.10.0
libtpu: 0.0.40
codegen_flags: <defaults>
</compile_context>

<pallas_src>
import math
import functools
import numpy as np
import jax
import jax.numpy as jnp
from jax import lax
from jax.experimental import pallas as pl
from jax.experimental.pallas import tpu as pltpu


def make_resample_kernel_np(k):
    k = np.asarray(k, dtype=np.float32)
    k = np.outer(k, k)
    k /= k.sum()
    return k


@functools.lru_cache(maxsize=1)
def _vmem_limit_bytes():
    """Generation-aware scoped-VMEM budget: ~75% of physical, capped at 100 MiB
    (~96 MiB on 128 MiB v5e/v6e, ~48 MiB on 64 MiB-per-TC v7x)."""
    cap = None
    try:
        cap = getattr(pltpu.get_tpu_info(), "vmem_capacity_bytes", None)
    except Exception:
        cap = None
    if not cap:
        cap = 64 * 1024 * 1024          # conservative default (v7x per-TC)
    return int(min(cap * 3 // 4, 100 * 1024 * 1024))


def _x_tile_budget():
    # per-buffer budget for the dominant (C x spatial) x tile; leaves room for
    # double-buffered out / skip tiles and the FIR constant matrices.
    return max(4 * 1024 * 1024, _vmem_limit_bytes() // 8)


def _up2_matrix(n_in, g):
    """Dense (2*n_in, n_in) matrix implementing the 1-D zero-insert(x2) +
    pad(2,1) + 4-tap FIR of UpFirDnUpsample, acting directly on the raw
    (un-padded) samples.  Taps that land on the zero padding (or outside this
    row window when used per-tile) are simply dropped; per-tile boundary taps
    are re-added in-kernel from the halo rows."""
    n_out = 2 * n_in
    u = np.zeros((n_out, n_in), np.float32)
    for j in range(n_out):
        p = j // 2
        if j % 2 == 0:
            if p - 1 >= 0:
                u[j, p - 1] += g[3]
            u[j, p] += g[1]
        else:
            u[j, p] += g[2]
            if p + 1 < n_in:
                u[j, p + 1] += g[0]
    return u


# ---------------------------------------------------------------------------
# Kernel 1: modulated 1x1 conv + bias (+ optional same-resolution skip add)
#           on a lane tile of the flattened spatial axis.
# ---------------------------------------------------------------------------
def _torgb_flat_kernel(*refs, has_skip):
    if has_skip:
        wmod_ref, bias_ref, x_ref, skip_ref, out_ref = refs
    else:
        wmod_ref, bias_ref, x_ref, out_ref = refs
    out = jnp.dot(wmod_ref[0], x_ref[0], preferred_element_type=jnp.float32)
    out = out + bias_ref[...]                 # (3, T) + (3, 1)
    if has_skip:
        out = out + skip_ref[0]
    out_ref[0] = out.astype(out_ref.dtype)


# ---------------------------------------------------------------------------
# Kernel 2: modulated 1x1 conv + bias + fused 2x UpFirDn skip upsample + add.
# Tiled over output rows; the raw skip tile is upsampled in VMEM with two small
# matmuls (separable FIR):  up_c = Uh @ (S_c @ Uw^T).  Tile-boundary taps come
# from 8-row halo blocks (index-map clamped) masked at the image borders.
# ---------------------------------------------------------------------------
def _torgb_fused_up_kernel(*refs, n_h, g0, g3, tiled):
    if tiled:
        (wmod_ref, bias_ref, x_ref, sp_ref, sptop_ref, spbot_ref,
         uwt_ref, uh_ref, out_ref) = refs
    else:
        (wmod_ref, bias_ref, x_ref, sp_ref, uwt_ref, uh_ref, out_ref) = refs

    Rh, W = out_ref.shape[2], out_ref.shape[3]

    # modulated 1x1 conv on the flattened (C, Rh*W) x tile (lane-dense MXU)
    conv = jnp.dot(wmod_ref[0], x_ref[0], preferred_element_type=jnp.float32)
    conv = conv + bias_ref[...]                         # (3, Rh*W) + (3, 1)
    conv = conv.reshape(3, Rh, W)

    # separable 2x UpFirDn upsample of the raw skip tile
    uwt = uwt_ref[...]                                  # (Ws, W)
    uh = uh_ref[...]                                    # (Rh, Rhs)
    sp = sp_ref[0]                                      # (3, Rhs, Ws)
    Rhs, Ws = sp.shape[1], sp.shape[2]
    # width pass, batched across RGB: (3*Rhs, Ws) @ (Ws, W)
    t = jnp.dot(sp.reshape(3 * Rhs, Ws), uwt,
                preferred_element_type=jnp.float32).reshape(3, Rhs, W)

    if tiled:
        h = pl.program_id(1)
        m_top = jnp.where(h > 0, 1.0, 0.0)              # first tile: pad row above
        m_bot = jnp.where(h < n_h - 1, 1.0, 0.0)        # last tile: pad row below
        # width-pass the single halo rows (row just above / just below the tile)
        top_w = jnp.dot(sptop_ref[0, :, 7, :], uwt,
                        preferred_element_type=jnp.float32)   # (3, W)
        bot_w = jnp.dot(spbot_ref[0, :, 0, :], uwt,
                        preferred_element_type=jnp.float32)   # (3, W)
        rid = lax.broadcasted_iota(jnp.int32, (Rh, 1), 0)
        wt_top = jnp.where(rid == 0, g3 * m_top, 0.0)          # only output row 0
        wt_bot = jnp.where(rid == Rh - 1, g0 * m_bot, 0.0)     # only output row Rh-1

    for c in range(3):                                  # static unroll over RGB
        up = jnp.dot(uh, t[c], preferred_element_type=jnp.float32)   # (Rh, W)
        if tiled:
            up = up + wt_top * top_w[c] + wt_bot * bot_w[c]
        out_ref[0, c] = (conv[c] + up).astype(out_ref.dtype)


# ---------------------------------------------------------------------------
# Tile pickers
# ---------------------------------------------------------------------------
def _pick_hw_tile(B, HW, C):
    """Lane tile for the flattened spatial axis (multiple of 128, divides HW)."""
    if HW % 128 != 0:
        return HW                       # tiny maps (4x4 / 8x8): one full block
    t = _x_tile_budget() // (max(C, 8) * 4)
    t = max(512, min(HW, 32768, t))
    t = (t // 128) * 128
    while HW % t:
        t -= 128
    if t >= HW and B < 2:               # keep both v7x TensorCores busy
        for cand in (HW // 2, HW // 4):
            if cand >= 512 and cand % 128 == 0 and HW % cand == 0:
                return cand
    return t


def _pick_row_tile(B, C, H, W):
    """Output-row tile Rh for the fused upsample path (divides H; multiple of 16
    when tiled so the raw-skip tile and 8-row halos stay sublane-aligned)."""
    if H % 16 != 0 or W % 8 != 0:
        return H                        # small maps: one block covering all rows
    rh = _x_tile_budget() // (max(C, 8) * W * 4)
    rh = max(16, min(H, (rh // 16) * 16))
    while H % rh:
        rh -= 16
    if rh >= H and B < 2 and H >= 32:   # expose >=2 parallel grid steps (v7x)
        for cand in (H // 2, H // 4):
            if cand >= 16 and cand % 16 == 0 and H % cand == 0:
                return cand
    return rh


# ---------------------------------------------------------------------------
# pallas_call wrappers
# ---------------------------------------------------------------------------
def modulated_conv_torgb_flat(x_flat, w_mod, rgb_b, skip_flat=None):
    B, C, HW = x_flat.shape
    T = _pick_hw_tile(B, HW, C)
    grid = (B, HW // T)
    const = lambda b, t: (0, 0)
    in_specs = [
        pl.BlockSpec((1, 3, C), lambda b, t: (b, 0, 0)),      # per-batch w_mod
        pl.BlockSpec((3, 1), const),                          # rgb bias
        pl.BlockSpec((1, C, T), lambda b, t: (b, 0, t)),      # x tile
    ]
    args = [w_mod, rgb_b, x_flat]
    if skip_flat is not None:
        in_specs.append(pl.BlockSpec((1, 3, T), lambda b, t: (b, 0, t)))
        args.append(skip_flat)
    kernel = functools.partial(_torgb_flat_kernel, has_skip=skip_flat is not None)
    return pl.pallas_call(
        kernel,
        out_shape=jax.ShapeDtypeStruct((B, 3, HW), x_flat.dtype),
        grid_spec=pltpu.PrefetchScalarGridSpec(
            num_scalar_prefetch=0,
            grid=grid,
            in_specs=in_specs,
            out_specs=pl.BlockSpec((1, 3, T), lambda b, t: (b, 0, t)),
        ),
        compiler_params=pltpu.CompilerParams(
            dimension_semantics=("parallel", "parallel"),
            vmem_limit_bytes=_vmem_limit_bytes()),
    )(*args)


def modulated_conv_torgb_fused_up(x, w_mod, rgb_b, skip, taps_1d, row_tile=None):
    B, C, H, W = x.shape
    _, _, Hs, Ws = skip.shape
    assert H == 2 * Hs and W == 2 * Ws
    g = [float(v) for v in np.asarray(taps_1d, np.float32)]

    Rh = row_tile if row_tile is not None else _pick_row_tile(B, C, H, W)
    assert H % Rh == 0
    n_h = H // Rh
    tiled = n_h > 1
    Rhs = Rh // 2
    T = Rh * W
    if tiled:
        assert Rh % 16 == 0 and T % 128 == 0 and Hs % 8 == 0

    x_flat = x.reshape(B, C, H * W)                     # free view change
    uwt = jnp.asarray(_up2_matrix(Ws, g).T)             # (Ws, W): width FIR
    uh = jnp.asarray(_up2_matrix(Rhs, g))               # (Rh, Rhs): per-tile height FIR

    const = lambda b, h: (0, 0)
    in_specs = [
        pl.BlockSpec((1, 3, C), lambda b, h: (b, 0, 0)),            # w_mod
        pl.BlockSpec((3, 1), const),                                # rgb bias
        pl.BlockSpec((1, C, T), lambda b, h: (b, 0, h)),            # x row tile (flattened)
        pl.BlockSpec((1, 3, Rhs, Ws), lambda b, h: (b, 0, h, 0)),   # raw skip rows
    ]
    args = [w_mod, rgb_b, x_flat, skip]
    if tiled:
        r8 = Rhs // 8
        last = Hs // 8 - 1
        in_specs += [
            # 8-row block ending just above the tile (clamped at the top edge)
            pl.BlockSpec((1, 3, 8, Ws),
                         lambda b, h: (b, 0, jnp.maximum(h * r8 - 1, 0), 0)),
            # 8-row block starting just below the tile (clamped at the bottom edge)
            pl.BlockSpec((1, 3, 8, Ws),
                         lambda b, h: (b, 0, jnp.minimum((h + 1) * r8, last), 0)),
        ]
        args += [skip, skip]
    in_specs += [
        pl.BlockSpec((Ws, W), const),                               # Uw^T
        pl.BlockSpec((Rh, Rhs), const),                             # Uh
    ]
    args += [uwt, uh]

    kernel = functools.partial(_torgb_fused_up_kernel, n_h=n_h,
                               g0=g[0], g3=g[3], tiled=tiled)
    return pl.pallas_call(
        kernel,
        out_shape=jax.ShapeDtypeStruct((B, 3, H, W), x.dtype),
        grid_spec=pltpu.PrefetchScalarGridSpec(
            num_scalar_prefetch=0,
            grid=(B, n_h),
            in_specs=in_specs,
            out_specs=pl.BlockSpec((1, 3, Rh, W), lambda b, h: (b, 0, h, 0)),
        ),
        compiler_params=pltpu.CompilerParams(
            dimension_semantics=("parallel", "parallel"),
            vmem_limit_bytes=_vmem_limit_bytes()),
    )(*args)


# ---------------------------------------------------------------------------
# ToRGB module (parameter container + forward wrapper)
# ---------------------------------------------------------------------------
class ToRGBPallas:
    def __init__(self, in_channels, num_style_feat, upsample=True,
                 resample_kernel=(1, 3, 3, 1), *, key):
        k0, k1 = jax.random.split(key)
        self.in_channels = in_channels
        self.num_style_feat = num_style_feat
        # EqualLinear(num_style_feat -> in_channels, bias_init_val=1, lr_mul=1)
        self.lin_scale = 1.0 / math.sqrt(num_style_feat)
        self.mod_weight = jax.random.normal(
            k0, (in_channels, num_style_feat), jnp.float32)
        self.mod_bias = jnp.ones((in_channels,), jnp.float32)
        # ModulatedConv2d(in_channels, 3, kernel_size=1, demodulate=False)
        self.conv_scale = 1.0 / math.sqrt(in_channels * 1 ** 2)
        self.conv_weight = jax.random.normal(
            k1, (3, in_channels), jnp.float32)           # (1,3,C,1,1) squeezed
        self.rgb_bias = jnp.zeros((3, 1), jnp.float32)   # ToRGB bias, zeros
        # pre-fold the equalized-lr scales
        self.mod_w_t_scaled = (self.mod_weight * self.lin_scale).T   # (S, C)
        self.conv_w_scaled = self.conv_scale * self.conv_weight      # (3, C)
        self.upsample = upsample
        self.fir_kernel = None
        self.fir_taps_1d = None
        if upsample:
            self.fir_kernel = make_resample_kernel_np(resample_kernel) * (2 ** 2)
            k1d = np.asarray(resample_kernel, np.float32)
            self.fir_taps_1d = (k1d / k1d.sum()) * 2.0   # separable 1-D taps

    def _modulated_weight(self, style):
        # hoisted style modulation: one tiny XLA matmul per call, shape (B,3,C)
        sv = jnp.dot(style, self.mod_w_t_scaled,
                     precision=lax.Precision.HIGHEST) + self.mod_bias[None, :]
        return self.conv_w_scaled[None, :, :] * sv[:, None, :]

    def __call__(self, x, style, skip=None, *, row_tile=None):
        B, C, H, W = x.shape
        w_mod = self._modulated_weight(style)
        if skip is not None and self.upsample:
            return modulated_conv_torgb_fused_up(
                x, w_mod, self.rgb_bias, skip, self.fir_taps_1d,
                row_tile=row_tile)
        x_flat = x.reshape(B, C, H * W)
        skip_flat = skip.reshape(B, 3, H * W) if skip is not None else None
        out_flat = modulated_conv_torgb_flat(x_flat, w_mod, self.rgb_bias,
                                             skip_flat)
        return out_flat.reshape(B, 3, H, W)


# ---------------------------------------------------------------------------
# Pure-JAX reference (mirrors the PyTorch forward semantics)
# ---------------------------------------------------------------------------
def torgb_reference(model, x, style, skip=None):
    sv = jnp.dot(style, (model.mod_weight * model.lin_scale).T,
                 precision=lax.Precision.HIGHEST) + model.mod_bias
    w = model.conv_scale * model.conv_weight[None] * sv[:, None, :]
    out = jnp.einsum('boc,bchw->bohw', w, x,
                     precision=lax.Precision.HIGHEST)
    out = out + model.rgb_bias.reshape(1, 3, 1, 1)
    if skip is not None:
        if model.upsample:
            kflip = jnp.asarray(model.fir_kernel)[::-1, ::-1]
            wf = jnp.broadcast_to(kflip[None, None], (3, 1, 4, 4))
            skip = lax.conv_general_dilated(
                skip, wf, window_strides=(1, 1), padding=((2, 2), (2, 2)),
                lhs_dilation=(2, 2), feature_group_count=3,
                dimension_numbers=('NCHW', 'OIHW', 'NCHW'),
                precision=lax.Precision.HIGHEST)
        out = out + skip
    return out


if __name__ == "__main__":
    key = jax.random.PRNGKey(0)
    kp, kx, ks, kk, kx2, kk2 = jax.random.split(key, 6)
    B, C, H, W, S = 2, 8, 16, 16, 16

    model = ToRGBPallas(C, S, upsample=True, key=kp)
    x = jax.random.normal(kx, (B, C, H, W), jnp.float32)
    style = jax.random.normal(ks, (B, S), jnp.float32)
    skip = jax.random.normal(kk, (B, 3, H // 2, W // 2), jnp.float32)

    # 1) fused modulated-conv + 2x UpFirDn skip upsample (untiled-row path)
    out = jax.block_until_ready(model(x, style, skip))
    ref = torgb_reference(model, x, style, skip)
    assert out.shape == (B, 3, H, W)
    np.testing.assert_allclose(np.asarray(out), np.asarray(ref),
                               rtol=1e-3, atol=1e-3)

    # 2) skip=None path (no zero skip streamed from HBM)
    out2 = jax.block_until_ready(model(x, style, None))
    ref2 = torgb_reference(model, x, style, None)
    np.testing.assert_allclose(np.asarray(out2), np.asarray(ref2),
                               rtol=1e-3, atol=1e-3)

    # 3) row-tiled fused path (exercises the halo blocks / boundary masks)
    H2 = W2 = 32
    x2 = jax.random.normal(kx2, (B, C, H2, W2), jnp.float32)
    skip2 = jax.random.normal(kk2, (B, 3, H2 // 2, W2 // 2), jnp.float32)
    out3 = jax.block_until_ready(model(x2, style, skip2, row_tile=16))
    ref3 = torgb_reference(model, x2, style, skip2)
    np.testing.assert_allclose(np.asarray(out3), np.asarray(ref3),
                               rtol=1e-3, atol=1e-3)

    # 4) upsample=False path (same-resolution fused skip add)
    model_nu = ToRGBPallas(C, S, upsample=False, key=kp)
    skip_same = jax.random.normal(kk, (B, 3, H, W), jnp.float32)
    out4 = jax.block_until_ready(model_nu(x, style, skip_same))
    ref4 = torgb_reference(model_nu, x, style, skip_same)
    np.testing.assert_allclose(np.asarray(out4), np.asarray(ref4),
                               rtol=1e-3, atol=1e-3)

    print("KERNEL_OK")
</pallas_src>

<mosaic_0001>
module attributes {stable_mosaic.version = 11 : i64} {
  func.func @_torgb_fused_up_kernel(%arg0: i32, %arg1: i32, %arg2: memref<1x3x8xf32, #tpu.memory_space<vmem>>, %arg3: memref<3x1xf32, #tpu.memory_space<vmem>>, %arg4: memref<1x8x256xf32, #tpu.memory_space<vmem>>, %arg5: memref<1x3x8x8xf32, #tpu.memory_space<vmem>>, %arg6: memref<8x16xf32, #tpu.memory_space<vmem>>, %arg7: memref<16x8xf32, #tpu.memory_space<vmem>>, %arg8: memref<1x3x16x16xf32, #tpu.memory_space<vmem>>) attributes {dimension_semantics = [#tpu.dimension_semantics<parallel>, #tpu.dimension_semantics<parallel>], iteration_bounds = array<i64: 2, 1>, scalar_prefetch = 0 : i64, scratch_operands = 0 : i64, tpu.core_type = #tpu.core_type<tc>, window_params = [{transform_indices = @transform_0, window_bounds = array<i64: 1, 3, 8>}, {pipeline_mode = #tpu.pipeline_mode<synchronous>, transform_indices = @transform_1, window_bounds = array<i64: 3, 1>}, {transform_indices = @transform_2, window_bounds = array<i64: 1, 8, 256>}, {transform_indices = @transform_3, window_bounds = array<i64: 1, 3, 8, 8>}, {pipeline_mode = #tpu.pipeline_mode<synchronous>, transform_indices = @transform_4, window_bounds = array<i64: 8, 16>}, {pipeline_mode = #tpu.pipeline_mode<synchronous>, transform_indices = @transform_5, window_bounds = array<i64: 16, 8>}, {transform_indices = @transform_6, window_bounds = array<i64: 1, 3, 16, 16>}]} {
    %c0 = arith.constant 0 : index
    %c0_0 = arith.constant 0 : index
    %c0_1 = arith.constant 0 : index
    %0 = vector.load %arg2[%c0, %c0_0, %c0_1] : memref<1x3x8xf32, #tpu.memory_space<vmem>>, vector<1x3x8xf32>
    %1 = vector.shape_cast %0 : vector<1x3x8xf32> to vector<3x8xf32>
    %c0_2 = arith.constant 0 : index
    %c0_3 = arith.constant 0 : index
    %c0_4 = arith.constant 0 : index
    %2 = vector.load %arg4[%c0_2, %c0_3, %c0_4] : memref<1x8x256xf32, #tpu.memory_space<vmem>>, vector<1x8x256xf32>
    %3 = vector.shape_cast %2 : vector<1x8x256xf32> to vector<8x256xf32>
    %cst = arith.constant dense<0.000000e+00> : vector<3x256xf32>
    %4 = tpu.matmul %1, %3, %cst {dimension_numbers = #tpu.dot_dimension_numbers<[1], [0], [0], [1], [0, 0, 1, 1], [], []>} : vector<3x8xf32>, vector<8x256xf32>, vector<3x256xf32> -> vector<3x256xf32>
    %c0_5 = arith.constant 0 : index
    %c0_6 = arith.constant 0 : index
    %5 = vector.load %arg3[%c0_5, %c0_6] : memref<3x1xf32, #tpu.memory_space<vmem>>, vector<3x1xf32>
    %6 = vector.broadcast %5 : vector<3x1xf32> to vector<3x256xf32>
    %7 = arith.addf %4, %6 : vector<3x256xf32>
    %8 = vector.shape_cast %7 : vector<3x256xf32> to vector<3x16x16xf32>
    %c0_7 = arith.constant 0 : index
    %c0_8 = arith.constant 0 : index
    %9 = vector.load %arg6[%c0_7, %c0_8] : memref<8x16xf32, #tpu.memory_space<vmem>>, vector<8x16xf32>
    %c0_9 = arith.constant 0 : index
    %c0_10 = arith.constant 0 : index
    %10 = vector.load %arg7[%c0_9, %c0_10] : memref<16x8xf32, #tpu.memory_space<vmem>>, vector<16x8xf32>
    %c0_11 = arith.constant 0 : index
    %c0_12 = arith.constant 0 : index
    %c0_13 = arith.constant 0 : index
    %c0_14 = arith.constant 0 : index
    %11 = vector.load %arg5[%c0_11, %c0_12, %c0_13, %c0_14] : memref<1x3x8x8xf32, #tpu.memory_space<vmem>>, vector<1x3x8x8xf32>
    %12 = vector.shape_cast %11 : vector<1x3x8x8xf32> to vector<3x8x8xf32>
    %13 = vector.shape_cast %12 : vector<3x8x8xf32> to vector<24x8xf32>
    %cst_15 = arith.constant dense<0.000000e+00> : vector<24x16xf32>
    %14 = tpu.matmul %13, %9, %cst_15 {dimension_numbers = #tpu.dot_dimension_numbers<[1], [0], [0], [1], [0, 0, 1, 1], [], []>} : vector<24x8xf32>, vector<8x16xf32>, vector<24x16xf32> -> vector<24x16xf32>
    %15 = vector.shape_cast %14 : vector<24x16xf32> to vector<3x8x16xf32>
    %16 = vector.extract_strided_slice %15 {offsets = [0, 0, 0], sizes = [1, 8, 16], strides = [1, 1, 1]} : vector<3x8x16xf32> to vector<1x8x16xf32>
    %17 = vector.shape_cast %16 : vector<1x8x16xf32> to vector<8x16xf32>
    %cst_16 = arith.constant dense<0.000000e+00> : vector<16x16xf32>
    %18 = tpu.matmul %10, %17, %cst_16 {dimension_numbers = #tpu.dot_dimension_numbers<[1], [0], [0], [1], [0, 0, 1, 1], [], []>} : vector<16x8xf32>, vector<8x16xf32>, vector<16x16xf32> -> vector<16x16xf32>
    %19 = vector.extract_strided_slice %8 {offsets = [0, 0, 0], sizes = [1, 16, 16], strides = [1, 1, 1]} : vector<3x16x16xf32> to vector<1x16x16xf32>
    %20 = vector.shape_cast %19 : vector<1x16x16xf32> to vector<16x16xf32>
    %21 = arith.addf %20, %18 : vector<16x16xf32>
    %c0_17 = arith.constant 0 : index
    %c0_18 = arith.constant 0 : index
    %c0_19 = arith.constant 0 : index
    %c0_20 = arith.constant 0 : index
    %22 = vector.load %arg8[%c0_17, %c0_18, %c0_19, %c0_20] : memref<1x3x16x16xf32, #tpu.memory_space<vmem>>, vector<1x1x16x16xf32>
    %23 = vector.shape_cast %22 : vector<1x1x16x16xf32> to vector<16x16xf32>
    %24 = vector.shape_cast %21 : vector<16x16xf32> to vector<1x1x16x16xf32>
    tpu.vector_store %arg8[%c0_17, %c0_18, %c0_19, %c0_20], %24 {strides = array<i32>} : memref<1x3x16x16xf32, #tpu.memory_space<vmem>>, vector<1x1x16x16xf32>,
    %25 = vector.extract_strided_slice %15 {offsets = [1, 0, 0], sizes = [1, 8, 16], strides = [1, 1, 1]} : vector<3x8x16xf32> to vector<1x8x16xf32>
    %26 = vector.shape_cast %25 : vector<1x8x16xf32> to vector<8x16xf32>
    %cst_21 = arith.constant dense<0.000000e+00> : vector<16x16xf32>
    %27 = tpu.matmul %10, %26, %cst_21 {dimension_numbers = #tpu.dot_dimension_numbers<[1], [0], [0], [1], [0, 0, 1, 1], [], []>} : vector<16x8xf32>, vector<8x16xf32>, vector<16x16xf32> -> vector<16x16xf32>
    %28 = vector.extract_strided_slice %8 {offsets = [1, 0, 0], sizes = [1, 16, 16], strides = [1, 1, 1]} : vector<3x16x16xf32> to vector<1x16x16xf32>
    %29 = vector.shape_cast %28 : vector<1x16x16xf32> to vector<16x16xf32>
    %30 = arith.addf %29, %27 : vector<16x16xf32>
    %c0_22 = arith.constant 0 : index
    %c1 = arith.constant 1 : index
    %c0_23 = arith.constant 0 : index
    %c0_24 = arith.constant 0 : index
    %31 = vector.load %arg8[%c0_22, %c1, %c0_23, %c0_24] : memref<1x3x16x16xf32, #tpu.memory_space<vmem>>, vector<1x1x16x16xf32>
    %32 = vector.shape_cast %31 : vector<1x1x16x16xf32> to vector<16x16xf32>
    %33 = vector.shape_cast %30 : vector<16x16xf32> to vector<1x1x16x16xf32>
    tpu.vector_store %arg8[%c0_22, %c1, %c0_23, %c0_24], %33 {strides = array<i32>} : memref<1x3x16x16xf32, #tpu.memory_space<vmem>>, vector<1x1x16x16xf32>,
    %34 = vector.extract_strided_slice %15 {offsets = [2, 0, 0], sizes = [1, 8, 16], strides = [1, 1, 1]} : vector<3x8x16xf32> to vector<1x8x16xf32>
    %35 = vector.shape_cast %34 : vector<1x8x16xf32> to vector<8x16xf32>
    %cst_25 = arith.constant dense<0.000000e+00> : vector<16x16xf32>
    %36 = tpu.matmul %10, %35, %cst_25 {dimension_numbers = #tpu.dot_dimension_numbers<[1], [0], [0], [1], [0, 0, 1, 1], [], []>} : vector<16x8xf32>, vector<8x16xf32>, vector<16x16xf32> -> vector<16x16xf32>
    %37 = vector.extract_strided_slice %8 {offsets = [2, 0, 0], sizes = [1, 16, 16], strides = [1, 1, 1]} : vector<3x16x16xf32> to vector<1x16x16xf32>
    %38 = vector.shape_cast %37 : vector<1x16x16xf32> to vector<16x16xf32>
    %39 = arith.addf %38, %36 : vector<16x16xf32>
    %c0_26 = arith.constant 0 : index
    %c2 = arith.constant 2 : index
    %c0_27 = arith.constant 0 : index
    %c0_28 = arith.constant 0 : index
    %40 = vector.load %arg8[%c0_26, %c2, %c0_27, %c0_28] : memref<1x3x16x16xf32, #tpu.memory_space<vmem>>, vector<1x1x16x16xf32>
    %41 = vector.shape_cast %40 : vector<1x1x16x16xf32> to vector<16x16xf32>
    %42 = vector.shape_cast %39 : vector<16x16xf32> to vector<1x1x16x16xf32>
    tpu.vector_store %arg8[%c0_26, %c2, %c0_27, %c0_28], %42 {strides = array<i32>} : memref<1x3x16x16xf32, #tpu.memory_space<vmem>>, vector<1x1x16x16xf32>,
    return
  }
  func.func @transform_0(%arg0: i32, %arg1: i32) -> (i32, i32, i32) {
    %c0_i32 = arith.constant 0 : i32
    %c0_i32_0 = arith.constant 0 : i32
    %c0_i32_1 = arith.constant 0 : i32
    return %arg0, %c0_i32, %c0_i32_0 : i32, i32, i32
  }
  func.func @transform_1(%arg0: i32, %arg1: i32) -> (i32, i32) {
    %c0_i32 = arith.constant 0 : i32
    %c0_i32_0 = arith.constant 0 : i32
    %c0_i32_1 = arith.constant 0 : i32
    return %c0_i32, %c0_i32_0 : i32, i32
  }
  func.func @transform_2(%arg0: i32, %arg1: i32) -> (i32, i32, i32) {
    %c0_i32 = arith.constant 0 : i32
    %c0_i32_0 = arith.constant 0 : i32
    return %arg0, %c0_i32, %arg1 : i32, i32, i32
  }
  func.func @transform_3(%arg0: i32, %arg1: i32) -> (i32, i32, i32, i32) {
    %c0_i32 = arith.constant 0 : i32
    %c0_i32_0 = arith.constant 0 : i32
    %c0_i32_1 = arith.constant 0 : i32
    return %arg0, %c0_i32, %arg1, %c0_i32_0 : i32, i32, i32, i32
  }
  func.func @transform_4(%arg0: i32, %arg1: i32) -> (i32, i32) {
    %c0_i32 = arith.constant 0 : i32
    %c0_i32_0 = arith.constant 0 : i32
    %c0_i32_1 = arith.constant 0 : i32
    return %c0_i32, %c0_i32_0 : i32, i32
  }
  func.func @transform_5(%arg0: i32, %arg1: i32) -> (i32, i32) {
    %c0_i32 = arith.constant 0 : i32
    %c0_i32_0 = arith.constant 0 : i32
    %c0_i32_1 = arith.constant 0 : i32
    return %c0_i32, %c0_i32_0 : i32, i32
  }
  func.func @transform_6(%arg0: i32, %arg1: i32) -> (i32, i32, i32, i32) {
    %c0_i32 = arith.constant 0 : i32
    %c0_i32_0 = arith.constant 0 : i32
    %c0_i32_1 = arith.constant 0 : i32
    return %arg0, %c0_i32, %arg1, %c0_i32_0 : i32, i32, i32, i32
  }
}

</mosaic_0001>

<llo_original>
// kernel: tpu_custom_call.1
$region0: #{tpu_custom_call.1}
  #allocation0 [shape = 'u32[]', space=smem, size = 0x4, offset = 0x4, fixed_abs, tag = 'smem constant byte address 0x4 - core index']
  #allocation1 [shape = 'u32[144,128]{1,0:T(1,128)}', space=vmem, size = 0x12000, scoped, tag = 'internal scratch']
  %s0 = inlined_call_operand.vmem [shape: f32[2,3,8], index: 0, kind: input, shape index: {}]
  %s1 = inlined_call_operand.vmem [shape: f32[3,1], index: 1, kind: input, shape index: {}]
  %s2 = inlined_call_operand.hbm [shape: f32[2,8,256], index: 2, kind: input, shape index: {}]
  %s3 = inlined_call_operand.vmem [shape: f32[2,3,8,8], index: 3, kind: input, shape index: {}]
  %s4 = inlined_call_operand.hbm [shape: f32[8,16], index: 4, kind: input, shape index: {}]
  %s5 = inlined_call_operand.vmem [shape: f32[16,8], index: 5, kind: input, shape index: {}]
  %s6 = inlined_call_operand.hbm [shape: f32[2,3,16,16], index: 6, kind: output, shape index: {}]
  %s7 = sld [smem:[#allocation0]]
  $region65: #{tpu_custom_call.1} parent=0
    _
  %s9 = ssub.s32 1, %s7
  %s10 = scalar_select 0, %s9, %s7
  $region1: #{tpu_custom_call.1} parent=0
    #allocation2 [shape = 'u8[16384]{0}', space=vmem, size = 0x4000, scoped, tag = 'input window, operand 2']
    #allocation3 [shape = 's32[2]{0}', space=sflag, size = 0x8, scoped, tag = 'scoped memory for tpu_custom_call.1']
    #allocation4 [shape = 's32[2]{0}', space=sflag, size = 0x8, scoped, tag = 'scoped memory for tpu_custom_call.1']
    #allocation5 [shape = 'u8[4096]{0}', space=vmem, size = 0x1000, scoped, tag = 'input window, operand 4, single buffered']
    #allocation6 [shape = 's32[1]{0}', space=sflag, size = 0x4, scoped, tag = 'scoped memory for tpu_custom_call.1']
    #allocation7 [shape = 'u8[49152]{0}', space=vmem, size = 0xc000, scoped, tag = 'output window, operand 0']
    %11 = vsyncpa [#allocation3], 0
    %s12 = scalar_lea.sflag [#allocation3], 1
    %13 = vsyncpa %s12, 0
    %14 = vsyncpa [#allocation6], 0
    %15 = vsyncpa [#allocation4], 0
    %s16 = scalar_lea.sflag [#allocation4], 1
    %17 = vsyncpa %s16, 0
    loop: start=0, step=1, limit=4
    $region2: #{tpu_custom_call.1} parent=1 // loop_pre_header
      _
    $region3: #{tpu_custom_call.1} parent=1 // loop_header
      %s19 = sphi 0, %s23
      %p20 = scmp.ge.s32.totalorder %s19, 4
      %s26 = sphi 0, %s38
      %s27 = sphi 0, %s34
      %s28 = sphi 0, %s26
      %s29 = sphi 0, %s27
      %s30 = sphi 0, %s28
      %s31 = sphi 0, %s29
      %s41 = sphi 0, %s43
      %s44 = sphi 0, %s41
      %s45 = sphi 0, %s44
      %s61 = sphi 0, %s45
      %s65 = sphi 0, %s65
      %s67 = sphi 0, %s65
      %s68 = sphi 0, %s67
      %s82 = sphi 0, %s68
      %s90 = sphi 0, %s92
      %s93 = sphi 0, %s90
      %s94 = sphi 0, %s93
      %s110 = sphi 0, %s94
      %s118 = sphi 0, %s120
      %s121 = sphi 0, %s118
      %s122 = sphi 0, %s121
      %s138 = sphi 0, %s122
      %s142 = sphi 0, %s142
      %s144 = sphi 0, %s142
      %s145 = sphi 0, %s144
      %s159 = sphi 0, %s145
      %s163 = sphi 0, %s163
      %s165 = sphi 0, %s163
      %s166 = sphi 0, %s165
      %s180 = sphi 0, %s166
      %s188 = sphi 0, %s190
      %s191 = sphi 0, %s188
      %s192 = sphi 0, %s191
      %s208 = sphi 0, %s192
    $region4: #{tpu_custom_call.1} parent=1 // loop_header_branch
      %22 = sbr.rel (%p20) target = $region8
    $region5: #{tpu_custom_call.1} parent=1 // loop_body
      %s24 = ssub.s32 %s19, 1
      %s25 = ssub.s32 %s19, 2
      %s32 = sadd.s32 1, %s27
      %p33 = scmp.ge.s32.totalorder %s32, 1
      %s34 = scalar_select %p33, 0, %s32
      %s35 = sadd.s32 1, %s26
      %s36 = scalar_select %p33, %s35, %s26
      %p37 = scmp.ge.s32.totalorder %s36, 2
      %s38 = scalar_select %p37, 0, %s36
      %s39 = ssub.s32 %s26, %s38
      %p40 = scmp.eq.s32.totalorder %s39, 0
      %s42 = sadd.s32 %s41, 1
      %s43 = scalar_select %p40, %s41, %s42
      %p46 = pneg %p40
      %p47 = scmp.eq.s32.totalorder %s19, 1
      %p48 = por %p46, %p47
      %p49 = scmp.ne.s32.totalorder %s41, %s44
      %p50 = scmp.eq.s32.totalorder %s19, 0
      %p51 = por %p49, %p50
      %p52 = scmp.ne.s32.totalorder %s41, %s44
      %p53 = scmp.eq.s32.totalorder %s24, 1
      %p54 = por %p52, %p53
      %p55 = scmp.ne.s32.totalorder %s44, %s45
      %p56 = scmp.eq.s32.totalorder %s24, 0
      %p57 = por %p55, %p56
      %p58 = scmp.ne.s32.totalorder %s44, %s45
      %p59 = scmp.eq.s32.totalorder %s25, 1
      %p60 = por %p58, %p59
      %p62 = scmp.ne.s32.totalorder %s45, %s61
      %p63 = scmp.eq.s32.totalorder %s25, 0
      %p64 = por %p62, %p63
      %s66 = sadd.s32 %s65, 1
      %p69 = scmp.eq.s32.totalorder %s19, 1
      %p70 = scmp.ne.s32.totalorder %s65, %s67
      %p71 = scmp.eq.s32.totalorder %s19, 0
      %p72 = por %p70, %p71
      %p73 = scmp.ne.s32.totalorder %s65, %s67
      %p74 = scmp.eq.s32.totalorder %s24, 1
      %p75 = por %p73, %p74
      %p76 = scmp.ne.s32.totalorder %s67, %s68
      %p77 = scmp.eq.s32.totalorder %s24, 0
      %p78 = por %p76, %p77
      %p79 = scmp.ne.s32.totalorder %s67, %s68
      %p80 = scmp.eq.s32.totalorder %s25, 1
      %p81 = por %p79, %p80
      %p83 = scmp.ne.s32.totalorder %s68, %s82
      %p84 = scmp.eq.s32.totalorder %s25, 0
      %p85 = por %p83, %p84
      %s86 = ssub.s32 %s26, %s38
      %s87 = ssub.s32 %s27, %s34
      %s88 = sor.u32 %s86, %s87
      %p89 = scmp.eq.s32.totalorder %s88, 0
      %s91 = sadd.s32 %s90, 1
      %s92 = scalar_select %p89, %s90, %s91
      %p95 = pneg %p89
      %p96 = scmp.eq.s32.totalorder %s19, 1
      %p97 = por %p95, %p96
      %p98 = scmp.ne.s32.totalorder %s90, %s93
      %p99 = scmp.eq.s32.totalorder %s19, 0
      %p100 = por %p98, %p99
      %p101 = scmp.ne.s32.totalorder %s90, %s93
      %p102 = scmp.eq.s32.totalorder %s24, 1
      %p103 = por %p101, %p102
      %p104 = scmp.ne.s32.totalorder %s93, %s94
      %p105 = scmp.eq.s32.totalorder %s24, 0
      %p106 = por %p104, %p105
      %p107 = scmp.ne.s32.totalorder %s93, %s94
      %p108 = scmp.eq.s32.totalorder %s25, 1
      %p109 = por %p107, %p108
      %p111 = scmp.ne.s32.totalorder %s94, %s110
      %p112 = scmp.eq.s32.totalorder %s25, 0
      %p113 = por %p111, %p112
      %s114 = ssub.s32 %s26, %s38
      %s115 = ssub.s32 %s27, %s34
      %s116 = sor.u32 %s114, %s115
      %p117 = scmp.eq.s32.totalorder %s116, 0
      %s119 = sadd.s32 %s118, 1
      %s120 = scalar_select %p117, %s118, %s119
      %p123 = pneg %p117
      %p124 = scmp.eq.s32.totalorder %s19, 1
      %p125 = por %p123, %p124
      %p126 = scmp.ne.s32.totalorder %s118, %s121
      %p127 = scmp.eq.s32.totalorder %s19, 0
      %p128 = por %p126, %p127
      %p129 = scmp.ne.s32.totalorder %s118, %s121
      %p130 = scmp.eq.s32.totalorder %s24, 1
      %p131 = por %p129, %p130
      %p132 = scmp.ne.s32.totalorder %s121, %s122
      %p133 = scmp.eq.s32.totalorder %s24, 0
      %p134 = por %p132, %p133
      %p135 = scmp.ne.s32.totalorder %s121, %s122
      %p136 = scmp.eq.s32.totalorder %s25, 1
      %p137 = por %p135, %p136
      %p139 = scmp.ne.s32.totalorder %s122, %s138
      %p140 = scmp.eq.s32.totalorder %s25, 0
      %p141 = por %p139, %p140
      %s143 = sadd.s32 %s142, 1
      %p146 = scmp.eq.s32.totalorder %s19, 1
      %p147 = scmp.ne.s32.totalorder %s142, %s144
      %p148 = scmp.eq.s32.totalorder %s19, 0
      %p149 = por %p147, %p148
      %p150 = scmp.ne.s32.totalorder %s142, %s144
      %p151 = scmp.eq.s32.totalorder %s24, 1
      %p152 = por %p150, %p151
      %p153 = scmp.ne.s32.totalorder %s144, %s145
      %p154 = scmp.eq.s32.totalorder %s24, 0
      %p155 = por %p153, %p154
      %p156 = scmp.ne.s32.totalorder %s144, %s145
      %p157 = scmp.eq.s32.totalorder %s25, 1
      %p158 = por %p156, %p157
      %p160 = scmp.ne.s32.totalorder %s145, %s159
      %p161 = scmp.eq.s32.totalorder %s25, 0
      %p162 = por %p160, %p161
      %s164 = sadd.s32 %s163, 1
      %p167 = scmp.eq.s32.totalorder %s19, 1
      %p168 = scmp.ne.s32.totalorder %s163, %s165
      %p169 = scmp.eq.s32.totalorder %s19, 0
      %p170 = por %p168, %p169
      %p171 = scmp.ne.s32.totalorder %s163, %s165
      %p172 = scmp.eq.s32.totalorder %s24, 1
      %p173 = por %p171, %p172
      %p174 = scmp.ne.s32.totalorder %s165, %s166
      %p175 = scmp.eq.s32.totalorder %s24, 0
      %p176 = por %p174, %p175
      %p177 = scmp.ne.s32.totalorder %s165, %s166
      %p178 = scmp.eq.s32.totalorder %s25, 1
      %p179 = por %p177, %p178
      %p181 = scmp.ne.s32.totalorder %s166, %s180
      %p182 = scmp.eq.s32.totalorder %s25, 0
      %p183 = por %p181, %p182
      %s184 = ssub.s32 %s26, %s38
      %s185 = ssub.s32 %s27, %s34
      %s186 = sor.u32 %s184, %s185
      %p187 = scmp.eq.s32.totalorder %s186, 0
      %s189 = sadd.s32 %s188, 1
      %s190 = scalar_select %p187, %s188, %s189
      %p193 = pneg %p187
      %p194 = scmp.eq.s32.totalorder %s19, 1
      %p195 = por %p193, %p194
      %p196 = scmp.ne.s32.totalorder %s188, %s191
      %p197 = scmp.eq.s32.totalorder %s19, 0
      %p198 = por %p196, %p197
      %p199 = scmp.ne.s32.totalorder %s188, %s191
      %p200 = scmp.eq.s32.totalorder %s24, 1
      %p201 = por %p199, %p200
      %p202 = scmp.ne.s32.totalorder %s191, %s192
      %p203 = scmp.eq.s32.totalorder %s24, 0
      %p204 = por %p202, %p203
      %p205 = scmp.ne.s32.totalorder %s191, %s192
      %p206 = scmp.eq.s32.totalorder %s25, 1
      %p207 = por %p205, %p206
      %p209 = scmp.ne.s32.totalorder %s192, %s208
      %p210 = scmp.eq.s32.totalorder %s25, 0
      %p211 = por %p209, %p210
      %p212 = scmp.le.s32.totalorder 1, %s19
      %p213 = scmp.lt.s32.totalorder %s19, 3
      %p214 = pnand %p212, %p213
      %p215 = pneg %p214
      // Predicated region
      $region9: #{tpu_custom_call.1} parent=5 // pred_check
        _
      $region10: #{tpu_custom_call.1} parent=5 // pred_check_branch
        %217 = sbr.rel (%p214) target = $region12
      $region11: #{tpu_custom_call.1} parent=5 // pred_region
        %s218 = ssub.s32 %s19, 1
        // Predicated region
        $region13: #{tpu_custom_call.1} parent=11 // pred_check
          %p219 = pneg %p78
        $region14: #{tpu_custom_call.1} parent=11 // pred_check_branch
          %221 = sbr.rel (%p219) target = $region16
        $region15: #{tpu_custom_call.1} parent=11 // pred_region
          _
        $region16: #{tpu_custom_call.1} parent=11 // pred_fallthru
          _
        // Predicated region
        $region17: #{tpu_custom_call.1} parent=11 // pred_check
          %p222 = pneg %p155
        $region18: #{tpu_custom_call.1} parent=11 // pred_check_branch
          %224 = sbr.rel (%p222) target = $region20
        $region19: #{tpu_custom_call.1} parent=11 // pred_region
          %s226 = ssub.s32 128, 128
          %227 = vsyncadd [#allocation6], %s226
          %s229 = sshll.u32 [#allocation5], 4
          %s230 = int_to_ptr.vmem [resolvable:$true] %s229
          %232 = dma.hbm_to_vmem [thread:$0]  %s4, 128, %s230, [#allocation6]
        $region20: #{tpu_custom_call.1} parent=11 // pred_fallthru
          _
        // Predicated region
        $region21: #{tpu_custom_call.1} parent=11 // pred_check
          %p233 = pneg %p176
        $region22: #{tpu_custom_call.1} parent=11 // pred_check_branch
          %235 = sbr.rel (%p233) target = $region24
        $region23: #{tpu_custom_call.1} parent=11 // pred_region
          _
        $region24: #{tpu_custom_call.1} parent=11 // pred_fallthru
          _
      $region12: #{tpu_custom_call.1} parent=5 // pred_fallthru
        _
      %p236 = scmp.lt.s32.totalorder %s19, 2
      // Predicated region
      $region25: #{tpu_custom_call.1} parent=5 // pred_check
        %p237 = pneg %p236
      $region26: #{tpu_custom_call.1} parent=5 // pred_check_branch
        %239 = sbr.rel (%p237) target = $region28
      $region27: #{tpu_custom_call.1} parent=5 // pred_region
        // Predicated region
        $region29: #{tpu_custom_call.1} parent=27 // pred_check
          %p240 = pneg %p51
        $region30: #{tpu_custom_call.1} parent=27 // pred_check_branch
          %242 = sbr.rel (%p240) target = $region32
        $region31: #{tpu_custom_call.1} parent=27 // pred_region
          %p243 = scmp.lt.s32.totalorder %s26, 1
          %s244 = scalar_select %p243, %s26, 1
          %s245 = smul.addr %s244, 4
          %s246 = scalar_lea.vmem %s0, %s245
        $region32: #{tpu_custom_call.1} parent=27 // pred_fallthru
          _
        // Predicated region
        $region33: #{tpu_custom_call.1} parent=27 // pred_check
          %p247 = pneg %p100
        $region34: #{tpu_custom_call.1} parent=27 // pred_check_branch
          %249 = sbr.rel (%p247) target = $region36
        $region35: #{tpu_custom_call.1} parent=27 // pred_region
          %s250 = sand.u32 %s90, 1
          %s251 = scalar_lea.sflag [#allocation3], %s250
          %s252 = sand.u32 %s90, 1
          %s253 = smul.addr %s252, 16
          %s254 = scalar_lea.vmem [#allocation2], %s253
          %s255 = smul.u32 2, %s27
          %s257 = ssub.s32 256, 256
          %258 = vsyncadd %s251, %s257
          %s259 = smul.addr %s26, 2
          %s260 = sadd.s32 %s255, %s259
          %s261 = smul.addr %s260, 128
          %s262 = scalar_lea.hbm %s2, %s261
          %s264 = sshll.u32 %s254, 4
          %s265 = int_to_ptr.vmem [resolvable:$true] %s264
          %267 = dma.hbm_to_vmem [thread:$0]  %s262, 256, %s265, %s251
        $region36: #{tpu_custom_call.1} parent=27 // pred_fallthru
          _
        // Predicated region
        $region37: #{tpu_custom_call.1} parent=27 // pred_check
          %p268 = pneg %p128
        $region38: #{tpu_custom_call.1} parent=27 // pred_check_branch
          %270 = sbr.rel (%p268) target = $region40
        $region39: #{tpu_custom_call.1} parent=27 // pred_region
          %p271 = scmp.lt.s32.totalorder %s26, 1
          %s272 = scalar_select %p271, %s26, 1
          %p273 = scmp.lt.s32.totalorder %s27, 0
          %s274 = scalar_select %p273, %s27, 0
          %s275 = smul.addr %s272, 3
          %s276 = sadd.s32 %s274, %s275
          %s277 = smul.addr %s276, 8
          %s278 = scalar_lea.vmem %s3, %s277
        $region40: #{tpu_custom_call.1} parent=27 // pred_fallthru
          _
      $region28: #{tpu_custom_call.1} parent=5 // pred_fallthru
        _
      %p279 = scmp.le.s32.totalorder 1, %s19
      %p280 = scmp.lt.s32.totalorder %s19, 3
      %p281 = pnand %p279, %p280
      %p282 = pneg %p281
      // Predicated region
      $region41: #{tpu_custom_call.1} parent=5 // pred_check
        _
      $region42: #{tpu_custom_call.1} parent=5 // pred_check_branch
        %284 = sbr.rel (%p281) target = $region44
      $region43: #{tpu_custom_call.1} parent=5 // pred_region
        %s285 = ssub.s32 %s19, 1
        %s286 = sand.u32 %s93, 1
        %s287 = scalar_lea.sflag [#allocation3], %s286
        %s288 = sand.u32 %s93, 1
        %s289 = smul.addr %s288, 16
        %s290 = scalar_lea.vmem [#allocation2], %s289
        // Predicated region
        $region45: #{tpu_custom_call.1} parent=43 // pred_check
          %p291 = pneg %p106
        $region46: #{tpu_custom_call.1} parent=43 // pred_check_branch
          %293 = sbr.rel (%p291) target = $region48
        $region47: #{tpu_custom_call.1} parent=43 // pred_region
          %294 = dma.done %s287, 256
        $region48: #{tpu_custom_call.1} parent=43 // pred_fallthru
          _
        // Predicated region
        $region49: #{tpu_custom_call.1} parent=43 // pred_check
          %p295 = pneg %p155
        $region50: #{tpu_custom_call.1} parent=43 // pred_check_branch
          %297 = sbr.rel (%p295) target = $region52
        $region51: #{tpu_custom_call.1} parent=43 // pred_region
          %298 = dma.done [#allocation6], 128
        $region52: #{tpu_custom_call.1} parent=43 // pred_fallthru
          _
        %p299 = scmp.lt.s32.totalorder %s28, 1
        %s300 = scalar_select %p299, %s28, 1
        %s301 = smul.addr %s300, 4
        %s302 = scalar_lea.vmem %s0, %s301
        %p303 = pneg %p57
        %p304 = pneg %p54
        %p305 = pneg %p78
        %p306 = pneg %p75
        %s307 = sand.u32 %s93, 1
        %s308 = scalar_lea.sflag [#allocation3], %s307
        %s309 = sand.u32 %s93, 1
        %s310 = smul.addr %s309, 16
        %s311 = scalar_lea.vmem [#allocation2], %s310
        %p312 = pneg %p106
        %p313 = pneg %p103
        %p314 = scmp.lt.s32.totalorder %s28, 1
        %s315 = scalar_select %p314, %s28, 1
        %p316 = scmp.lt.s32.totalorder %s29, 0
        %s317 = scalar_select %p316, %s29, 0
        %s318 = smul.addr %s315, 3
        %s319 = sadd.s32 %s317, %s318
        %s320 = smul.addr %s319, 8
        %s321 = scalar_lea.vmem %s3, %s320
        %p322 = pneg %p134
        %p323 = pneg %p131
        %p324 = pneg %p155
        %p325 = pneg %p152
        %p326 = pneg %p176
        %p327 = pneg %p173
        %p328 = pneg %p204
        %p329 = pneg %p201
        %s330 = sand.u32 %s191, 1
        %s331 = scalar_lea.sflag [#allocation4], %s330
        %s332 = sand.u32 %s191, 1
        %s333 = smul.addr %s332, 48
        %s334 = scalar_lea.vmem [#allocation7], %s333
        %p335 = scmp.lt.s32.totalorder %s28, 1
        %s336 = scalar_select %p335, %s28, 1
        %s337 = smul.addr %s336, 4
        %s338 = scalar_lea.vmem %s0, %s337
        %s339 = smul.u32 2, %s29
        %p340 = scmp.lt.s32.totalorder %s28, 1
        %s341 = scalar_select %p340, %s28, 1
        %p342 = scmp.lt.s32.totalorder %s29, 0
        %s343 = scalar_select %p342, %s29, 0
        %s344 = smul.addr %s341, 3
        %s345 = sadd.s32 %s343, %s344
        %s346 = smul.addr %s345, 8
        %s347 = scalar_lea.vmem %s3, %s346
        %s348 = smul.u32 2, %s29
        %v349 = vld [vmem:[%s338] sm:$0x7]
        %v350 = vld [vmem:[%s290] sm:$0xff]
        %v351 = vld [vmem:[%s290 + $0x8] sm:$0xff]
        %v352 = vld [vmem:[%s1] sm:$0x7]
        %354 = vset.pattern.permute.xlu0 0
        %355 = vperm.xlu0 %354, %v352
        %v356 = vpop.permute.xlu0 %355
        %vm358 = vcmask 64512
        %v360 = vsel %vm358, %v349, 0
        %362 = vmatprep.subr.mxu0 %v351
        %363 = vmatpush1.msra.mxu0 %v350
        %364 = vmatprep.subr.mxu0 0.0
        %365 = vmatpush1.msra.mxu0 0.0
        %366 = vmatprep.subr.mxu0 0.0
        %367 = vmatpush1.msra.mxu0 0.0
        %368 = vmatprep.subr.mxu0 0.0
        %369 = vmatpush1.msra.mxu0 0.0
        %370 = vmatprep.subr.mxu0 0.0
        %371 = vmatpush1.msra.mxu0 0.0
        %372 = vmatprep.subr.mxu0 0.0
        %373 = vmatpush1.msra.mxu0 0.0
        %374 = vmatprep.subr.mxu0 0.0
        %375 = vmatpush1.msra.mxu0 0.0
        %376 = vmatprep.subr.mxu0 0.0
        %377 = vmatpush1.msra.mxu0 0.0
        %378 = vmatprep.subr.mxu0 0.0
        %379 = vmatpush1.msra.mxu0 0.0
        %380 = vmatprep.subr.mxu0 0.0
        %381 = vmatpush1.msra.mxu0 0.0
        %382 = vmatprep.subr.mxu0 0.0
        %383 = vmatpush1.msra.mxu0 0.0
        %384 = vmatprep.subr.mxu0 0.0
        %385 = vmatpush1.msra.mxu0 0.0
        %386 = vmatprep.subr.mxu0 0.0
        %387 = vmatpush1.msra.mxu0 0.0
        %388 = vmatprep.subr.mxu0 0.0
        %389 = vmatpush1.msra.mxu0 0.0
        %390 = vmatprep.subr.mxu0 0.0
        %391 = vmatpush1.msra.mxu0 0.0
        %392 = vmatprep.subr.mxu0 0.0
        %393 = vmatpush1.msra.mxu0 0.0
        %394 = vmatprep.subr.mxu0 0.0
        %395 = vmatpush1.msra.mxu0 0.0
        %396 = vmatprep.subr.mxu0 0.0
        %397 = vmatpush1.msra.mxu0 0.0
        %398 = vmatprep.subr.mxu0 0.0
        %399 = vmatpush1.msra.mxu0 0.0
        %400 = vmatprep.subr.mxu0 0.0
        %401 = vmatpush1.msra.mxu0 0.0
        %402 = vmatprep.subr.mxu0 0.0
        %403 = vmatpush1.msra.mxu0 0.0
        %404 = vmatprep.subr.mxu0 0.0
        %405 = vmatpush1.msra.mxu0 0.0
        %406 = vmatprep.subr.mxu0 0.0
        %407 = vmatpush1.msra.mxu0 0.0
        %408 = vmatprep.subr.mxu0 0.0
        %409 = vmatpush1.msra.mxu0 0.0
        %410 = vmatprep.subr.mxu0 0.0
        %411 = vmatpush1.msra.mxu0 0.0
        %412 = vmatprep.subr.mxu0 0.0
        %413 = vmatpush1.msra.mxu0 0.0
        %414 = vmatprep.subr.mxu0 0.0
        %415 = vmatpush1.msra.mxu0 0.0
        %416 = vmatprep.subr.mxu0 0.0
        %417 = vmatpush1.msra.mxu0 0.0
        %418 = vmatprep.subr.mxu0 0.0
        %419 = vmatpush1.msra.mxu0 0.0
        %420 = vmatprep.subr.mxu0 0.0
        %421 = vmatpush1.msra.mxu0 0.0
        %422 = vmatprep.subr.mxu0 0.0
        %423 = vmatpush1.msra.mxu0 0.0
        %424 = vmatprep.subr.mxu0 0.0
        %425 = vmatpush1.msra.mxu0 0.0
        %426 = vmatprep.mubr.f32.mxu0 0.0
        %427 = vmatmul.mubr.f32.gmra.mrb[0].mxu0 %v360
        %v428 = vpop.f32.mrb[0].mxu0
        %v429 = vadd.f32 %v356, %v428
        %v430 = vpop.f32.mrb[0].mxu0
        %v431 = vadd.f32 %v356, %v430
        %432 = vdwg.mxu0
        %434 = vrot.lane.b32.xlu0 %v429, 112
        %v435 = vpop.permute.xlu0 %434
        %437 = vrot.lane.b32.xlu0 %v429, 96
        %v438 = vpop.permute.xlu0 %437
        %440 = vrot.lane.b32.xlu0 %v429, 80
        %v441 = vpop.permute.xlu0 %440
        %443 = vrot.lane.b32.xlu0 %v429, 64
        %v444 = vpop.permute.xlu0 %443
        %446 = vrot.lane.b32.xlu0 %v429, 48
        %v447 = vpop.permute.xlu0 %446
        %449 = vrot.lane.b32.xlu0 %v429, 32
        %v450 = vpop.permute.xlu0 %449
        %452 = vrot.lane.b32.xlu0 %v429, 16
        %v453 = vpop.permute.xlu0 %452
        %456 = vrot.lane.b32.xlu0 %v431, 112
        %v457 = vpop.permute.xlu0 %456
        %459 = vrot.lane.b32.xlu0 %v431, 96
        %v460 = vpop.permute.xlu0 %459
        %462 = vrot.lane.b32.xlu0 %v431, 80
        %v463 = vpop.permute.xlu0 %462
        %465 = vrot.lane.b32.xlu0 %v431, 64
        %v466 = vpop.permute.xlu0 %465
        %468 = vrot.lane.b32.xlu0 %v431, 48
        %v469 = vpop.permute.xlu0 %468
        %471 = vrot.lane.b32.xlu0 %v431, 32
        %v472 = vpop.permute.xlu0 %471
        %474 = vrot.lane.b32.xlu0 %v431, 16
        %v475 = vpop.permute.xlu0 %474
        %v477 = vcombine.low %v429, %v438
        %v479 = vunpack.c.l.s4 1983009808
        %v480 = vunpack.c.0.s8 %v479
        %v481 = vlaneseq
        %v482 = vshrl.u32 %v481, 7
        %v483 = vsub.s32 %v480, %v482
        %v484 = vrot.slane %v477, %v483
        %v485 = vcombine.low %v435, %v441
        %v487 = vunpack.c.l.s4 1983009808
        %v488 = vunpack.c.0.s8 %v487
        %v489 = vlaneseq
        %v490 = vshrl.u32 %v489, 7
        %v491 = vsub.s32 %v488, %v490
        %v492 = vrot.slane %v485, %v491
        %v493 = vcombine.low %v444, %v450
        %v495 = vunpack.c.l.s4 1983009808
        %v496 = vunpack.c.0.s8 %v495
        %v497 = vlaneseq
        %v498 = vshrl.u32 %v497, 7
        %v499 = vsub.s32 %v496, %v498
        %v500 = vrot.slane %v493, %v499
        %v501 = vcombine.low %v447, %v453
        %v503 = vunpack.c.l.s4 1983009808
        %v504 = vunpack.c.0.s8 %v503
        %v505 = vlaneseq
        %v506 = vshrl.u32 %v505, 7
        %v507 = vsub.s32 %v504, %v506
        %v508 = vrot.slane %v501, %v507
        %v509 = vcombine.low %v484, %v492
        %v510 = vcombine.high %v484, %v492
        %v512 = vunpack.c.l.s4 1934713408
        %v513 = vunpack.c.0.s8 %v512
        %v514 = vlaneseq
        %v515 = vshrl.u32 %v514, 7
        %v516 = vsub.s32 %v513, %v515
        %v517 = vrot.slane %v509, %v516
        %v519 = vunpack.c.l.s4 1934713408
        %v520 = vunpack.c.0.s8 %v519
        %v521 = vlaneseq
        %v522 = vshrl.u32 %v521, 7
        %v523 = vsub.s32 %v520, %v522
        %v524 = vrot.slane %v510, %v523
        %v525 = vcombine.low %v500, %v508
        %v526 = vcombine.high %v500, %v508
        %v528 = vunpack.c.l.s4 1934713408
        %v529 = vunpack.c.0.s8 %v528
        %v530 = vlaneseq
        %v531 = vshrl.u32 %v530, 7
        %v532 = vsub.s32 %v529, %v531
        %v533 = vrot.slane %v525, %v532
        %v535 = vunpack.c.l.s4 1934713408
        %v536 = vunpack.c.0.s8 %v535
        %v537 = vlaneseq
        %v538 = vshrl.u32 %v537, 7
        %v539 = vsub.s32 %v536, %v538
        %v540 = vrot.slane %v526, %v539
        %v541 = vcombine.low %v517, %v533
        %v542 = vcombine.high %v517, %v533
        %v543 = vcombine.low %v524, %v540
        %v544 = vcombine.low %v431, %v460
        %v546 = vunpack.c.l.s4 1983009808
        %v547 = vunpack.c.0.s8 %v546
        %v548 = vlaneseq
        %v549 = vshrl.u32 %v548, 7
        %v550 = vsub.s32 %v547, %v549
        %v551 = vrot.slane %v544, %v550
        %v552 = vcombine.low %v457, %v463
        %v554 = vunpack.c.l.s4 1983009808
        %v555 = vunpack.c.0.s8 %v554
        %v556 = vlaneseq
        %v557 = vshrl.u32 %v556, 7
        %v558 = vsub.s32 %v555, %v557
        %v559 = vrot.slane %v552, %v558
        %v560 = vcombine.low %v466, %v472
        %v562 = vunpack.c.l.s4 1983009808
        %v563 = vunpack.c.0.s8 %v562
        %v564 = vlaneseq
        %v565 = vshrl.u32 %v564, 7
        %v566 = vsub.s32 %v563, %v565
        %v567 = vrot.slane %v560, %v566
        %v568 = vcombine.low %v469, %v475
        %v570 = vunpack.c.l.s4 1983009808
        %v571 = vunpack.c.0.s8 %v570
        %v572 = vlaneseq
        %v573 = vshrl.u32 %v572, 7
        %v574 = vsub.s32 %v571, %v573
        %v575 = vrot.slane %v568, %v574
        %v576 = vcombine.low %v551, %v559
        %v577 = vcombine.high %v551, %v559
        %v579 = vunpack.c.l.s4 1934713408
        %v580 = vunpack.c.0.s8 %v579
        %v581 = vlaneseq
        %v582 = vshrl.u32 %v581, 7
        %v583 = vsub.s32 %v580, %v582
        %v584 = vrot.slane %v576, %v583
        %v586 = vunpack.c.l.s4 1934713408
        %v587 = vunpack.c.0.s8 %v586
        %v588 = vlaneseq
        %v589 = vshrl.u32 %v588, 7
        %v590 = vsub.s32 %v587, %v589
        %v591 = vrot.slane %v577, %v590
        %v592 = vcombine.low %v567, %v575
        %v593 = vcombine.high %v567, %v575
        %v595 = vunpack.c.l.s4 1934713408
        %v596 = vunpack.c.0.s8 %v595
        %v597 = vlaneseq
        %v598 = vshrl.u32 %v597, 7
        %v599 = vsub.s32 %v596, %v598
        %v600 = vrot.slane %v592, %v599
        %v602 = vunpack.c.l.s4 1934713408
        %v603 = vunpack.c.0.s8 %v602
        %v604 = vlaneseq
        %v605 = vshrl.u32 %v604, 7
        %v606 = vsub.s32 %v603, %v605
        %v607 = vrot.slane %v593, %v606
        %v608 = vcombine.low %v584, %v600
        %v609 = vcombine.high %v584, %v600
        %v610 = vcombine.low %v591, %v607
        %v611 = vld [vmem:[#allocation5] sm:$0xff]
        %v612 = vld [vmem:[%s5] sm:$0xff]
        %v613 = vld [vmem:[%s5 + $0x8] sm:$0xff]
        %v614 = vld [vmem:[%s347] sm:$0xff]
        %v615 = vld [vmem:[%s347 + $0x8] sm:$0xff]
        %v616 = vld [vmem:[%s347 + $0x10] sm:$0xff]
        %v618 = vsel %vm358, %v614, 0
        %v621 = vsel %vm358, %v615, 0
        %v624 = vsel %vm358, %v616, 0
        %626 = vmatprep.subr.mxu0 0.0
        %627 = vmatpush1.msra.mxu0 %v611
        %628 = vmatprep.subr.mxu0 0.0
        %629 = vmatpush1.msra.mxu0 0.0
        %630 = vmatprep.subr.mxu0 0.0
        %631 = vmatpush1.msra.mxu0 0.0
        %632 = vmatprep.subr.mxu0 0.0
        %633 = vmatpush1.msra.mxu0 0.0
        %634 = vmatprep.subr.mxu0 0.0
        %635 = vmatpush1.msra.mxu0 0.0
        %636 = vmatprep.subr.mxu0 0.0
        %637 = vmatpush1.msra.mxu0 0.0
        %638 = vmatprep.subr.mxu0 0.0
        %639 = vmatpush1.msra.mxu0 0.0
        %640 = vmatprep.subr.mxu0 0.0
        %641 = vmatpush1.msra.mxu0 0.0
        %642 = vmatprep.subr.mxu0 0.0
        %643 = vmatpush1.msra.mxu0 0.0
        %644 = vmatprep.subr.mxu0 0.0
        %645 = vmatpush1.msra.mxu0 0.0
        %646 = vmatprep.subr.mxu0 0.0
        %647 = vmatpush1.msra.mxu0 0.0
        %648 = vmatprep.subr.mxu0 0.0
        %649 = vmatpush1.msra.mxu0 0.0
        %650 = vmatprep.subr.mxu0 0.0
        %651 = vmatpush1.msra.mxu0 0.0
        %652 = vmatprep.subr.mxu0 0.0
        %653 = vmatpush1.msra.mxu0 0.0
        %654 = vmatprep.subr.mxu0 0.0
        %655 = vmatpush1.msra.mxu0 0.0
        %656 = vmatprep.subr.mxu0 0.0
        %657 = vmatpush1.msra.mxu0 0.0
        %658 = vmatprep.subr.mxu0 0.0
        %659 = vmatpush1.msra.mxu0 0.0
        %660 = vmatprep.subr.mxu0 0.0
        %661 = vmatpush1.msra.mxu0 0.0
        %662 = vmatprep.subr.mxu0 0.0
        %663 = vmatpush1.msra.mxu0 0.0
        %664 = vmatprep.subr.mxu0 0.0
        %665 = vmatpush1.msra.mxu0 0.0
        %666 = vmatprep.subr.mxu0 0.0
        %667 = vmatpush1.msra.mxu0 0.0
        %668 = vmatprep.subr.mxu0 0.0
        %669 = vmatpush1.msra.mxu0 0.0
        %670 = vmatprep.subr.mxu0 0.0
        %671 = vmatpush1.msra.mxu0 0.0
        %672 = vmatprep.subr.mxu0 0.0
        %673 = vmatpush1.msra.mxu0 0.0
        %674 = vmatprep.subr.mxu0 0.0
        %675 = vmatpush1.msra.mxu0 0.0
        %676 = vmatprep.subr.mxu0 0.0
        %677 = vmatpush1.msra.mxu0 0.0
        %678 = vmatprep.subr.mxu0 0.0
        %679 = vmatpush1.msra.mxu0 0.0
        %680 = vmatprep.subr.mxu0 0.0
        %681 = vmatpush1.msra.mxu0 0.0
        %682 = vmatprep.subr.mxu0 0.0
        %683 = vmatpush1.msra.mxu0 0.0
        %684 = vmatprep.subr.mxu0 0.0
        %685 = vmatpush1.msra.mxu0 0.0
        %686 = vmatprep.subr.mxu0 0.0
        %687 = vmatpush1.msra.mxu0 0.0
        %688 = vmatprep.subr.mxu0 0.0
        %689 = vmatpush1.msra.mxu0 0.0
        %690 = vmatprep.mubr.f32.mxu0 0.0
        %691 = vmatmul.mubr.f32.gmra.mrb[0].mxu0 %v618
        %v692 = vpop.f32.mrb[0].mxu0
        %v693 = vadd.f32 0.0, %v692
        %v694 = vpop.f32.mrb[0].mxu0
        %695 = vmatprep.mubr.f32.mxu0 0.0
        %696 = vmatmul.mubr.f32.gmra.mrb[0].mxu0 %v621
        %v697 = vpop.f32.mrb[0].mxu0
        %v698 = vadd.f32 0.0, %v697
        %v699 = vpop.f32.mrb[0].mxu0
        %700 = vmatprep.mubr.f32.mxu0 0.0
        %701 = vmatmul.mubr.f32.gmra.mrb[0].mxu0 %v624
        %v702 = vpop.f32.mrb[0].mxu0
        %v703 = vadd.f32 0.0, %v702
        %v704 = vpop.f32.mrb[0].mxu0
        %705 = vdwg.mxu0
        %v707 = vsel %vm358, %v612, 0
        %v710 = vsel %vm358, %v613, 0
        %712 = vmatprep.subr.mxu0 0.0
        %713 = vmatpush1.msra.mxu0 %v693
        %714 = vmatprep.subr.mxu0 0.0
        %715 = vmatpush1.msra.mxu0 0.0
        %716 = vmatprep.subr.mxu0 0.0
        %717 = vmatpush1.msra.mxu0 0.0
        %718 = vmatprep.subr.mxu0 0.0
        %719 = vmatpush1.msra.mxu0 0.0
        %720 = vmatprep.subr.mxu0 0.0
        %721 = vmatpush1.msra.mxu0 0.0
        %722 = vmatprep.subr.mxu0 0.0
        %723 = vmatpush1.msra.mxu0 0.0
        %724 = vmatprep.subr.mxu0 0.0
        %725 = vmatpush1.msra.mxu0 0.0
        %726 = vmatprep.subr.mxu0 0.0
        %727 = vmatpush1.msra.mxu0 0.0
        %728 = vmatprep.subr.mxu0 0.0
        %729 = vmatpush1.msra.mxu0 0.0
        %730 = vmatprep.subr.mxu0 0.0
        %731 = vmatpush1.msra.mxu0 0.0
        %732 = vmatprep.subr.mxu0 0.0
        %733 = vmatpush1.msra.mxu0 0.0
        %734 = vmatprep.subr.mxu0 0.0
        %735 = vmatpush1.msra.mxu0 0.0
        %736 = vmatprep.subr.mxu0 0.0
        %737 = vmatpush1.msra.mxu0 0.0
        %738 = vmatprep.subr.mxu0 0.0
        %739 = vmatpush1.msra.mxu0 0.0
        %740 = vmatprep.subr.mxu0 0.0
        %741 = vmatpush1.msra.mxu0 0.0
        %742 = vmatprep.subr.mxu0 0.0
        %743 = vmatpush1.msra.mxu0 0.0
        %744 = vmatprep.subr.mxu0 0.0
        %745 = vmatpush1.msra.mxu0 0.0
        %746 = vmatprep.subr.mxu0 0.0
        %747 = vmatpush1.msra.mxu0 0.0
        %748 = vmatprep.subr.mxu0 0.0
        %749 = vmatpush1.msra.mxu0 0.0
        %750 = vmatprep.subr.mxu0 0.0
        %751 = vmatpush1.msra.mxu0 0.0
        %752 = vmatprep.subr.mxu0 0.0
        %753 = vmatpush1.msra.mxu0 0.0
        %754 = vmatprep.subr.mxu0 0.0
        %755 = vmatpush1.msra.mxu0 0.0
        %756 = vmatprep.subr.mxu0 0.0
        %757 = vmatpush1.msra.mxu0 0.0
        %758 = vmatprep.subr.mxu0 0.0
        %759 = vmatpush1.msra.mxu0 0.0
        %760 = vmatprep.subr.mxu0 0.0
        %761 = vmatpush1.msra.mxu0 0.0
        %762 = vmatprep.subr.mxu0 0.0
        %763 = vmatpush1.msra.mxu0 0.0
        %764 = vmatprep.subr.mxu0 0.0
        %765 = vmatpush1.msra.mxu0 0.0
        %766 = vmatprep.subr.mxu0 0.0
        %767 = vmatpush1.msra.mxu0 0.0
        %768 = vmatprep.subr.mxu0 0.0
        %769 = vmatpush1.msra.mxu0 0.0
        %770 = vmatprep.subr.mxu0 0.0
        %771 = vmatpush1.msra.mxu0 0.0
        %772 = vmatprep.subr.mxu0 0.0
        %773 = vmatpush1.msra.mxu0 0.0
        %774 = vmatprep.subr.mxu0 0.0
        %775 = vmatpush1.msra.mxu0 0.0
        %776 = vmatprep.mubr.f32.mxu0 0.0
        %777 = vmatmul.mubr.f32.gmra.mrb[0].mxu0 %v707
        %v778 = vpop.f32.mrb[0].mxu0
        %v779 = vadd.f32 0.0, %v778
        %v780 = vpop.f32.mrb[0].mxu0
        %781 = vmatprep.mubr.f32.mxu0 0.0
        %782 = vmatmul.mubr.f32.gmra.mrb[0].mxu0 %v710
        %v783 = vpop.f32.mrb[0].mxu0
        %v784 = vadd.f32 0.0, %v783
        %v785 = vpop.f32.mrb[0].mxu0
        %786 = vdwg.mxu0
        %v787 = vadd.f32 %v541, %v779
        %v788 = vadd.f32 %v608, %v784
        %vm789 = vcmask 130048
        %790 = vst.msk [vmem:[%s334] sm:$0xff] %vm789, %v787
        %791 = vst.msk [vmem:[%s334 + $0x8] sm:$0xff] %vm789, %v788
        %792 = vmatprep.subr.mxu0 0.0
        %793 = vmatpush1.msra.mxu0 %v698
        %794 = vmatprep.subr.mxu0 0.0
        %795 = vmatpush1.msra.mxu0 0.0
        %796 = vmatprep.subr.mxu0 0.0
        %797 = vmatpush1.msra.mxu0 0.0
        %798 = vmatprep.subr.mxu0 0.0
        %799 = vmatpush1.msra.mxu0 0.0
        %800 = vmatprep.subr.mxu0 0.0
        %801 = vmatpush1.msra.mxu0 0.0
        %802 = vmatprep.subr.mxu0 0.0
        %803 = vmatpush1.msra.mxu0 0.0
        %804 = vmatprep.subr.mxu0 0.0
        %805 = vmatpush1.msra.mxu0 0.0
        %806 = vmatprep.subr.mxu0 0.0
        %807 = vmatpush1.msra.mxu0 0.0
        %808 = vmatprep.subr.mxu0 0.0
        %809 = vmatpush1.msra.mxu0 0.0
        %810 = vmatprep.subr.mxu0 0.0
        %811 = vmatpush1.msra.mxu0 0.0
        %812 = vmatprep.subr.mxu0 0.0
        %813 = vmatpush1.msra.mxu0 0.0
        %814 = vmatprep.subr.mxu0 0.0
        %815 = vmatpush1.msra.mxu0 0.0
        %816 = vmatprep.subr.mxu0 0.0
        %817 = vmatpush1.msra.mxu0 0.0
        %818 = vmatprep.subr.mxu0 0.0
        %819 = vmatpush1.msra.mxu0 0.0
        %820 = vmatprep.subr.mxu0 0.0
        %821 = vmatpush1.msra.mxu0 0.0
        %822 = vmatprep.subr.mxu0 0.0
        %823 = vmatpush1.msra.mxu0 0.0
        %824 = vmatprep.subr.mxu0 0.0
        %825 = vmatpush1.msra.mxu0 0.0
        %826 = vmatprep.subr.mxu0 0.0
        %827 = vmatpush1.msra.mxu0 0.0
        %828 = vmatprep.subr.mxu0 0.0
        %829 = vmatpush1.msra.mxu0 0.0
        %830 = vmatprep.subr.mxu0 0.0
        %831 = vmatpush1.msra.mxu0 0.0
        %832 = vmatprep.subr.mxu0 0.0
        %833 = vmatpush1.msra.mxu0 0.0
        %834 = vmatprep.subr.mxu0 0.0
        %835 = vmatpush1.msra.mxu0 0.0
        %836 = vmatprep.subr.mxu0 0.0
        %837 = vmatpush1.msra.mxu0 0.0
        %838 = vmatprep.subr.mxu0 0.0
        %839 = vmatpush1.msra.mxu0 0.0
        %840 = vmatprep.subr.mxu0 0.0
        %841 = vmatpush1.msra.mxu0 0.0
        %842 = vmatprep.subr.mxu0 0.0
        %843 = vmatpush1.msra.mxu0 0.0
        %844 = vmatprep.subr.mxu0 0.0
        %845 = vmatpush1.msra.mxu0 0.0
        %846 = vmatprep.subr.mxu0 0.0
        %847 = vmatpush1.msra.mxu0 0.0
        %848 = vmatprep.subr.mxu0 0.0
        %849 = vmatpush1.msra.mxu0 0.0
        %850 = vmatprep.subr.mxu0 0.0
        %851 = vmatpush1.msra.mxu0 0.0
        %852 = vmatprep.subr.mxu0 0.0
        %853 = vmatpush1.msra.mxu0 0.0
        %854 = vmatprep.subr.mxu0 0.0
        %855 = vmatpush1.msra.mxu0 0.0
        %856 = vmatprep.mubr.f32.mxu0 0.0
        %857 = vmatmul.mubr.f32.gmra.mrb[0].mxu0 %v707
        %v858 = vpop.f32.mrb[0].mxu0
        %v859 = vadd.f32 0.0, %v858
        %v860 = vpop.f32.mrb[0].mxu0
        %861 = vmatprep.mubr.f32.mxu0 0.0
        %862 = vmatmul.mubr.f32.gmra.mrb[0].mxu0 %v710
        %v863 = vpop.f32.mrb[0].mxu0
        %v864 = vadd.f32 0.0, %v863
        %v865 = vpop.f32.mrb[0].mxu0
        %866 = vdwg.mxu0
        %v867 = vadd.f32 %v542, %v859
        %v868 = vadd.f32 %v609, %v864
        %s869 = scalar_lea.vmem %s334, 16 [#allocation7]
        %870 = vst.msk [vmem:[%s869] sm:$0xff] %vm789, %v867
        %871 = vst.msk [vmem:[%s869 + $0x8] sm:$0xff] %vm789, %v868
        %872 = vmatprep.subr.mxu0 0.0
        %873 = vmatpush1.msra.mxu0 %v703
        %874 = vmatprep.subr.mxu0 0.0
        %875 = vmatpush1.msra.mxu0 0.0
        %876 = vmatprep.subr.mxu0 0.0
        %877 = vmatpush1.msra.mxu0 0.0
        %878 = vmatprep.subr.mxu0 0.0
        %879 = vmatpush1.msra.mxu0 0.0
        %880 = vmatprep.subr.mxu0 0.0
        %881 = vmatpush1.msra.mxu0 0.0
        %882 = vmatprep.subr.mxu0 0.0
        %883 = vmatpush1.msra.mxu0 0.0
        %884 = vmatprep.subr.mxu0 0.0
        %885 = vmatpush1.msra.mxu0 0.0
        %886 = vmatprep.subr.mxu0 0.0
        %887 = vmatpush1.msra.mxu0 0.0
        %888 = vmatprep.subr.mxu0 0.0
        %889 = vmatpush1.msra.mxu0 0.0
        %890 = vmatprep.subr.mxu0 0.0
        %891 = vmatpush1.msra.mxu0 0.0
        %892 = vmatprep.subr.mxu0 0.0
        %893 = vmatpush1.msra.mxu0 0.0
        %894 = vmatprep.subr.mxu0 0.0
        %895 = vmatpush1.msra.mxu0 0.0
        %896 = vmatprep.subr.mxu0 0.0
        %897 = vmatpush1.msra.mxu0 0.0
        %898 = vmatprep.subr.mxu0 0.0
        %899 = vmatpush1.msra.mxu0 0.0
        %900 = vmatprep.subr.mxu0 0.0
        %901 = vmatpush1.msra.mxu0 0.0
        %902 = vmatprep.subr.mxu0 0.0
        %903 = vmatpush1.msra.mxu0 0.0
        %904 = vmatprep.subr.mxu0 0.0
        %905 = vmatpush1.msra.mxu0 0.0
        %906 = vmatprep.subr.mxu0 0.0
        %907 = vmatpush1.msra.mxu0 0.0
        %908 = vmatprep.subr.mxu0 0.0
        %909 = vmatpush1.msra.mxu0 0.0
        %910 = vmatprep.subr.mxu0 0.0
        %911 = vmatpush1.msra.mxu0 0.0
        %912 = vmatprep.subr.mxu0 0.0
        %913 = vmatpush1.msra.mxu0 0.0
        %914 = vmatprep.subr.mxu0 0.0
        %915 = vmatpush1.msra.mxu0 0.0
        %916 = vmatprep.subr.mxu0 0.0
        %917 = vmatpush1.msra.mxu0 0.0
        %918 = vmatprep.subr.mxu0 0.0
        %919 = vmatpush1.msra.mxu0 0.0
        %920 = vmatprep.subr.mxu0 0.0
        %921 = vmatpush1.msra.mxu0 0.0
        %922 = vmatprep.subr.mxu0 0.0
        %923 = vmatpush1.msra.mxu0 0.0
        %924 = vmatprep.subr.mxu0 0.0
        %925 = vmatpush1.msra.mxu0 0.0
        %926 = vmatprep.subr.mxu0 0.0
        %927 = vmatpush1.msra.mxu0 0.0
        %928 = vmatprep.subr.mxu0 0.0
        %929 = vmatpush1.msra.mxu0 0.0
        %930 = vmatprep.subr.mxu0 0.0
        %931 = vmatpush1.msra.mxu0 0.0
        %932 = vmatprep.subr.mxu0 0.0
        %933 = vmatpush1.msra.mxu0 0.0
        %934 = vmatprep.subr.mxu0 0.0
        %935 = vmatpush1.msra.mxu0 0.0
        %936 = vmatprep.mubr.f32.mxu0 0.0
        %937 = vmatmul.mubr.f32.gmra.mrb[0].mxu0 %v707
        %v938 = vpop.f32.mrb[0].mxu0
        %v939 = vadd.f32 0.0, %v938
        %v940 = vpop.f32.mrb[0].mxu0
        %941 = vmatprep.mubr.f32.mxu0 0.0
        %942 = vmatmul.mubr.f32.gmra.mrb[0].mxu0 %v710
        %v943 = vpop.f32.mrb[0].mxu0
        %v944 = vadd.f32 0.0, %v943
        %v945 = vpop.f32.mrb[0].mxu0
        %946 = vdwg.mxu0
        %v947 = vadd.f32 %v543, %v939
        %v948 = vadd.f32 %v610, %v944
        %s949 = scalar_lea.vmem %s334, 32 [#allocation7]
        %950 = vst.msk [vmem:[%s949] sm:$0xff] %vm789, %v947
        %951 = vst.msk [vmem:[%s949 + $0x8] sm:$0xff] %vm789, %v948
        %s952 = sand.u32 %s191, 1
        %s953 = scalar_lea.sflag [#allocation4], %s952
        %s954 = sand.u32 %s191, 1
        %s955 = smul.addr %s954, 48
        %s956 = scalar_lea.vmem [#allocation7], %s955
        // Predicated region
        $region53: #{tpu_custom_call.1} parent=43 // pred_check
          %p957 = pneg %p201
        $region54: #{tpu_custom_call.1} parent=43 // pred_check_branch
          %959 = sbr.rel (%p957) target = $region56
        $region55: #{tpu_custom_call.1} parent=43 // pred_region
          %s960 = smul.u32 2, %s29
          %s962 = ssub.s32 768, 768
          %963 = vsyncadd %s953, %s962
          %s964 = smul.addr %s28, 6
          %s965 = sadd.s32 %s960, %s964
          %s966 = smul.addr %s965, 128
          %s967 = scalar_lea.hbm %s6, %s966
          %s968 = sshll.u32 %s956, 4
          %s969 = int_to_ptr.vmem [resolvable:$true] %s968
          %974 = dma.vmem_to_hbm [thread:$0]  %s969, 768, %s967, %s953, 128, 128, 8
        $region56: #{tpu_custom_call.1} parent=43 // pred_fallthru
          _
      $region44: #{tpu_custom_call.1} parent=5 // pred_fallthru
        _
      %p975 = scmp.le.s32.totalorder 2, %s19
      // Predicated region
      $region57: #{tpu_custom_call.1} parent=5 // pred_check
        %p976 = pneg %p975
      $region58: #{tpu_custom_call.1} parent=5 // pred_check_branch
        %978 = sbr.rel (%p976) target = $region60
      $region59: #{tpu_custom_call.1} parent=5 // pred_region
        %s979 = ssub.s32 %s19, 2
        // Predicated region
        $region61: #{tpu_custom_call.1} parent=59 // pred_check
          %p980 = pneg %p207
        $region62: #{tpu_custom_call.1} parent=59 // pred_check_branch
          %982 = sbr.rel (%p980) target = $region64
        $region63: #{tpu_custom_call.1} parent=59 // pred_region
          %s983 = sand.u32 %s192, 1
          %s984 = scalar_lea.sflag [#allocation4], %s983
          %s985 = sand.u32 %s192, 1
          %s986 = smul.addr %s985, 48
          %s987 = scalar_lea.vmem [#allocation7], %s986
          %988 = dma.done %s984, 768
        $region64: #{tpu_custom_call.1} parent=59 // pred_fallthru
          _
      $region60: #{tpu_custom_call.1} parent=5 // pred_fallthru
        _
    $region6: #{tpu_custom_call.1} parent=1 // loop_footer
      %s23 = sadd.s32 1, %s19
    $region7: #{tpu_custom_call.1} parent=1 // loop_footer_branch
      %18 = sbr.rel target = $region3
    $region8: #{tpu_custom_call.1} parent=1 // loop_exit
      _
    %989 = vsyncpa [#allocation3], 1
    %s990 = scalar_lea.sflag [#allocation3], 1
    %991 = vsyncpa %s990, 1
    %992 = vsyncpa [#allocation6], 1
    %993 = vsyncpa [#allocation4], 1
    %s994 = scalar_lea.sflag [#allocation4], 1
    %995 = vsyncpa %s994, 1

</llo_original>
